<compile_context>
chip_gen: v6e
topology: v6e:2x2x1
jax: 0.10.0
libtpu: 0.0.40
codegen_flags: <defaults>
</compile_context>

<pallas_src>
import functools

import jax
import jax.numpy as jnp
from jax.experimental import pallas as pl
from jax.experimental.pallas import tpu as pltpu


def _dh_kernel(x_ref, w1t_ref, b1_ref, w2t_ref, b2_ref, wc_ref, bc_ref, o_ref,
               *, C, S, HW, O):
    x = x_ref[...]                                        # (TB, C*HW), lane-dense

    # ---- AdaptiveAvgPool2d(1): per-channel mean over the lane axis ----------
    inv_hw = 1.0 / HW
    pooled = [jnp.sum(x[:, c * HW:(c + 1) * HW], axis=-1, keepdims=True) * inv_hw
              for c in range(C)]                          # C x (TB, 1)

    # ---- SE MLP, unrolled over the tiny contraction dims --------------------
    # Each term is a small 2-D lane-broadcast multiply on the VPU; no
    # (TB, S, C) broadcast temporaries. Exact f32.
    h = b1_ref[...]                                       # (1, S) -> broadcasts over TB
    for c in range(C):
        h = h + pooled[c] * w1t_ref[c:c + 1, :]           # (TB,1)*(1,S) -> (TB,S)
    h = jnp.maximum(h, 0.0)

    a = b2_ref[...]                                       # (1, C)
    for s in range(S):
        a = a + h[:, s:s + 1] * w2t_ref[s:s + 1, :]       # (TB,1)*(1,C) -> (TB,C)
    a = jax.nn.sigmoid(a)                                 # channel attention

    # ---- 1x1 conv with attention folded into the weight ---------------------
    # wc @ (a * x) == (wc * a) @ x  -> unrolled channel accumulation, no
    # (TB, C, HW) temporary; conv weight/bias are SMEM scalars.
    for oc in range(O):
        acc = None
        for c in range(C):
            scale = a[:, c:c + 1] * wc_ref[oc * C + c]            # (TB,1) * scalar
            term = scale * x[:, c * HW:(c + 1) * HW]              # (TB, HW) lane-dense
            acc = term if acc is None else acc + term
        o_ref[:, oc * HW:(oc + 1) * HW] = jnp.tanh(acc + bc_ref[oc])


def direction_heading(x, params, *, max_tb=512):
    """x: (B, C, H, W) float32.  Returns (B, 2, H, W) float32."""
    w1, b1, w2, b2, wc, bc = params
    B, C, H, W = x.shape
    HW = H * W
    S = w1.shape[0]
    O = wc.shape[0]

    # Batch blocking: sublane-full (multiple of 8), large enough to amortize
    # per-step overhead, >=2 parallel steps when the batch allows it (v7x has
    # two TensorCores), and small enough that double-buffered x/out blocks stay
    # inside every generation's scoped-VMEM budget (TB=512 -> ~6 MiB of blocks).
    if B <= max_tb:
        B_pad = pl.cdiv(B, 8) * 8
        TB = B_pad
        if B_pad >= 64 and B_pad % 16 == 0:
            TB = B_pad // 2                      # two parallel steps for dual-TC chips
    else:
        TB = max_tb
        B_pad = pl.cdiv(B, TB) * TB

    x_flat = x.reshape(B, C * HW)                # contiguous reshape -> dense 2-D slab
    if B_pad != B:
        x_flat = jnp.pad(x_flat, ((0, B_pad - B), (0, 0)))

    kernel = functools.partial(_dh_kernel, C=C, S=S, HW=HW, O=O)

    out_flat = pl.pallas_call(
        kernel,
        out_shape=jax.ShapeDtypeStruct((B_pad, O * HW), jnp.float32),
        grid_spec=pltpu.PrefetchScalarGridSpec(
            num_scalar_prefetch=0,
            grid=(B_pad // TB,),
            in_specs=[
                pl.BlockSpec((TB, C * HW), lambda b: (b, 0)),        # x slab
                pl.BlockSpec((C, S), lambda b: (0, 0)),              # W1^T
                pl.BlockSpec((1, S), lambda b: (0, 0)),              # b1
                pl.BlockSpec((S, C), lambda b: (0, 0)),              # W2^T
                pl.BlockSpec((1, C), lambda b: (0, 0)),              # b2
                pl.BlockSpec(memory_space=pltpu.MemorySpace.SMEM),   # conv weight (scalars)
                pl.BlockSpec(memory_space=pltpu.MemorySpace.SMEM),   # conv bias (scalars)
            ],
            out_specs=pl.BlockSpec((TB, O * HW), lambda b: (b, 0)),
        ),
        compiler_params=pltpu.CompilerParams(
            dimension_semantics=("parallel",),
            vmem_limit_bytes=32 * 1024 * 1024,
        ),
    )(x_flat, jnp.transpose(w1), b1, jnp.transpose(w2), b2, wc.reshape(-1), bc)

    # Contiguous reshape back to NCHW (no transpose); padded rows dropped.
    return out_flat[:B].reshape(B, O, H, W)


def ref_forward(x, params):
    """Pure-JAX reference of the PyTorch forward pass."""
    w1, b1, w2, b2, wc, bc = params
    pooled = x.mean(axis=(2, 3))                                      # (B, C)
    h = jax.nn.relu(pooled @ w1.T + b1[0])                            # (B, S)
    a = jax.nn.sigmoid(h @ w2.T + b2[0])                              # (B, C)
    y = a[:, :, None, None] * x                                       # (B, C, H, W)
    o = jnp.einsum("bchw,oc->bohw", y, wc) + bc[None, :, None, None]  # (B, 2, H, W)
    return jnp.tanh(o)


def init_params(key, ipc, sqz, out_ch=2):
    """Deterministic parameter init (shapes match the nn.Module __init__)."""
    ks = jax.random.split(key, 6)
    w1 = jax.random.normal(ks[0], (sqz, ipc), jnp.float32) * 0.3      # Linear(ipc, sqz).weight
    b1 = jax.random.normal(ks[1], (1, sqz), jnp.float32) * 0.1        # Linear(ipc, sqz).bias
    w2 = jax.random.normal(ks[2], (ipc, sqz), jnp.float32) * 0.3      # Linear(sqz, ipc).weight
    b2 = jax.random.normal(ks[3], (1, ipc), jnp.float32) * 0.1        # Linear(sqz, ipc).bias
    wc = jax.random.normal(ks[4], (out_ch, ipc), jnp.float32) * 0.3   # Conv2d(ipc, 2, 1).weight
    bc = jax.random.normal(ks[5], (out_ch,), jnp.float32) * 0.1       # Conv2d(ipc, 2, 1).bias
    return (w1, b1, w2, b2, wc, bc)


if __name__ == "__main__":
    B, C, H, W = 2, 4, 16, 16     # ipc = 4
    SQZ = 8                       # sqz = 8

    key = jax.random.PRNGKey(0)
    kx, kp = jax.random.split(key)
    x = jax.random.normal(kx, (B, C, H, W), jnp.float32)
    params = init_params(kp, C, SQZ)

    fwd = jax.jit(direction_heading)            # keep pad/reshapes fused around the kernel
    out = jax.block_until_ready(fwd(x, params))

    ref = ref_forward(x, params)
    assert out.shape == (B, 2, H, W)
    assert jnp.allclose(out, ref, atol=1e-5, rtol=1e-5), "Pallas output mismatch vs reference"

    print("KERNEL_OK")
</pallas_src>

<mosaic_0001>
module attributes {stable_mosaic.version = 11 : i64} {
  func.func @_dh_kernel(%arg0: i32, %arg1: memref<8x1024xf32, #tpu.memory_space<vmem>>, %arg2: memref<4x8xf32, #tpu.memory_space<vmem>>, %arg3: memref<1x8xf32, #tpu.memory_space<vmem>>, %arg4: memref<8x4xf32, #tpu.memory_space<vmem>>, %arg5: memref<1x4xf32, #tpu.memory_space<vmem>>, %arg6: memref<8xf32, #tpu.memory_space<smem>>, %arg7: memref<2xf32, #tpu.memory_space<smem>>, %arg8: memref<8x512xf32, #tpu.memory_space<vmem>>) attributes {dimension_semantics = [#tpu.dimension_semantics<parallel>], iteration_bounds = array<i64: 1>, scalar_prefetch = 0 : i64, scratch_operands = 0 : i64, tpu.core_type = #tpu.core_type<tc>, window_params = [{transform_indices = @transform_0, window_bounds = array<i64: 8, 1024>}, {pipeline_mode = #tpu.pipeline_mode<synchronous>, transform_indices = @transform_1, window_bounds = array<i64: 4, 8>}, {pipeline_mode = #tpu.pipeline_mode<synchronous>, transform_indices = @transform_2, window_bounds = array<i64: 1, 8>}, {pipeline_mode = #tpu.pipeline_mode<synchronous>, transform_indices = @transform_3, window_bounds = array<i64: 8, 4>}, {pipeline_mode = #tpu.pipeline_mode<synchronous>, transform_indices = @transform_4, window_bounds = array<i64: 1, 4>}, {transform_indices = @transform_5, window_bounds = array<i64: 8>}, {transform_indices = @transform_6, window_bounds = array<i64: 2>}, {transform_indices = @transform_7, window_bounds = array<i64: 8, 512>}]} {
    %c0 = arith.constant 0 : index
    %c0_0 = arith.constant 0 : index
    %0 = vector.load %arg1[%c0, %c0_0] : memref<8x1024xf32, #tpu.memory_space<vmem>>, vector<8x1024xf32>
    %1 = vector.extract_strided_slice %0 {offsets = [0, 0], sizes = [8, 256], strides = [1, 1]} : vector<8x1024xf32> to vector<8x256xf32>
    %cst = arith.constant dense<0.000000e+00> : vector<8xf32>
    %2 = vector.multi_reduction <add>, %1, %cst [1] : vector<8x256xf32> to vector<8xf32>
    %3 = vector.shape_cast %2 : vector<8xf32> to vector<8x1xf32>
    %cst_1 = arith.constant 3.906250e-03 : f32
    %4 = vector.broadcast %cst_1 : f32 to vector<8x1xf32>
    %5 = arith.mulf %3, %4 : vector<8x1xf32>
    %6 = vector.extract_strided_slice %0 {offsets = [0, 256], sizes = [8, 256], strides = [1, 1]} : vector<8x1024xf32> to vector<8x256xf32>
    %cst_2 = arith.constant dense<0.000000e+00> : vector<8xf32>
    %7 = vector.multi_reduction <add>, %6, %cst_2 [1] : vector<8x256xf32> to vector<8xf32>
    %8 = vector.shape_cast %7 : vector<8xf32> to vector<8x1xf32>
    %cst_3 = arith.constant 3.906250e-03 : f32
    %9 = vector.broadcast %cst_3 : f32 to vector<8x1xf32>
    %10 = arith.mulf %8, %9 : vector<8x1xf32>
    %11 = vector.extract_strided_slice %0 {offsets = [0, 512], sizes = [8, 256], strides = [1, 1]} : vector<8x1024xf32> to vector<8x256xf32>
    %cst_4 = arith.constant dense<0.000000e+00> : vector<8xf32>
    %12 = vector.multi_reduction <add>, %11, %cst_4 [1] : vector<8x256xf32> to vector<8xf32>
    %13 = vector.shape_cast %12 : vector<8xf32> to vector<8x1xf32>
    %cst_5 = arith.constant 3.906250e-03 : f32
    %14 = vector.broadcast %cst_5 : f32 to vector<8x1xf32>
    %15 = arith.mulf %13, %14 : vector<8x1xf32>
    %16 = vector.extract_strided_slice %0 {offsets = [0, 768], sizes = [8, 256], strides = [1, 1]} : vector<8x1024xf32> to vector<8x256xf32>
    %cst_6 = arith.constant dense<0.000000e+00> : vector<8xf32>
    %17 = vector.multi_reduction <add>, %16, %cst_6 [1] : vector<8x256xf32> to vector<8xf32>
    %18 = vector.shape_cast %17 : vector<8xf32> to vector<8x1xf32>
    %cst_7 = arith.constant 3.906250e-03 : f32
    %19 = vector.broadcast %cst_7 : f32 to vector<8x1xf32>
    %20 = arith.mulf %18, %19 : vector<8x1xf32>
    %c0_8 = arith.constant 0 : index
    %c0_9 = arith.constant 0 : index
    %21 = vector.load %arg3[%c0_8, %c0_9] : memref<1x8xf32, #tpu.memory_space<vmem>>, vector<1x8xf32>
    %c0_10 = arith.constant 0 : index
    %c0_11 = arith.constant 0 : index
    %22 = vector.load %arg2[%c0_10, %c0_11] : memref<4x8xf32, #tpu.memory_space<vmem>>, vector<1x8xf32>
    %23 = vector.broadcast %5 : vector<8x1xf32> to vector<8x8xf32>
    %24 = vector.broadcast %22 : vector<1x8xf32> to vector<8x8xf32>
    %25 = arith.mulf %23, %24 : vector<8x8xf32>
    %26 = vector.broadcast %21 : vector<1x8xf32> to vector<8x8xf32>
    %27 = arith.addf %26, %25 : vector<8x8xf32>
    %c1 = arith.constant 1 : index
    %c0_12 = arith.constant 0 : index
    %28 = vector.load %arg2[%c1, %c0_12] : memref<4x8xf32, #tpu.memory_space<vmem>>, vector<1x8xf32>
    %29 = vector.broadcast %10 : vector<8x1xf32> to vector<8x8xf32>
    %30 = vector.broadcast %28 : vector<1x8xf32> to vector<8x8xf32>
    %31 = arith.mulf %29, %30 : vector<8x8xf32>
    %32 = arith.addf %27, %31 : vector<8x8xf32>
    %c2 = arith.constant 2 : index
    %c0_13 = arith.constant 0 : index
    %33 = vector.load %arg2[%c2, %c0_13] : memref<4x8xf32, #tpu.memory_space<vmem>>, vector<1x8xf32>
    %34 = vector.broadcast %15 : vector<8x1xf32> to vector<8x8xf32>
    %35 = vector.broadcast %33 : vector<1x8xf32> to vector<8x8xf32>
    %36 = arith.mulf %34, %35 : vector<8x8xf32>
    %37 = arith.addf %32, %36 : vector<8x8xf32>
    %c3 = arith.constant 3 : index
    %c0_14 = arith.constant 0 : index
    %38 = vector.load %arg2[%c3, %c0_14] : memref<4x8xf32, #tpu.memory_space<vmem>>, vector<1x8xf32>
    %39 = vector.broadcast %20 : vector<8x1xf32> to vector<8x8xf32>
    %40 = vector.broadcast %38 : vector<1x8xf32> to vector<8x8xf32>
    %41 = arith.mulf %39, %40 : vector<8x8xf32>
    %42 = arith.addf %37, %41 : vector<8x8xf32>
    %cst_15 = arith.constant 0.000000e+00 : f32
    %43 = vector.broadcast %cst_15 : f32 to vector<8x8xf32>
    %44 = arith.maximumf %42, %43 : vector<8x8xf32>
    %c0_16 = arith.constant 0 : index
    %c0_17 = arith.constant 0 : index
    %45 = vector.load %arg5[%c0_16, %c0_17] : memref<1x4xf32, #tpu.memory_space<vmem>>, vector<1x4xf32>
    %46 = vector.extract_strided_slice %44 {offsets = [0, 0], sizes = [8, 1], strides = [1, 1]} : vector<8x8xf32> to vector<8x1xf32>
    %c0_18 = arith.constant 0 : index
    %c0_19 = arith.constant 0 : index
    %47 = vector.load %arg4[%c0_18, %c0_19] : memref<8x4xf32, #tpu.memory_space<vmem>>, vector<1x4xf32>
    %48 = vector.broadcast %46 : vector<8x1xf32> to vector<8x4xf32>
    %49 = vector.broadcast %47 : vector<1x4xf32> to vector<8x4xf32>
    %50 = arith.mulf %48, %49 : vector<8x4xf32>
    %51 = vector.broadcast %45 : vector<1x4xf32> to vector<8x4xf32>
    %52 = arith.addf %51, %50 : vector<8x4xf32>
    %53 = vector.extract_strided_slice %44 {offsets = [0, 1], sizes = [8, 1], strides = [1, 1]} : vector<8x8xf32> to vector<8x1xf32>
    %c1_20 = arith.constant 1 : index
    %c0_21 = arith.constant 0 : index
    %54 = vector.load %arg4[%c1_20, %c0_21] : memref<8x4xf32, #tpu.memory_space<vmem>>, vector<1x4xf32>
    %55 = vector.broadcast %53 : vector<8x1xf32> to vector<8x4xf32>
    %56 = vector.broadcast %54 : vector<1x4xf32> to vector<8x4xf32>
    %57 = arith.mulf %55, %56 : vector<8x4xf32>
    %58 = arith.addf %52, %57 : vector<8x4xf32>
    %59 = vector.extract_strided_slice %44 {offsets = [0, 2], sizes = [8, 1], strides = [1, 1]} : vector<8x8xf32> to vector<8x1xf32>
    %c2_22 = arith.constant 2 : index
    %c0_23 = arith.constant 0 : index
    %60 = vector.load %arg4[%c2_22, %c0_23] : memref<8x4xf32, #tpu.memory_space<vmem>>, vector<1x4xf32>
    %61 = vector.broadcast %59 : vector<8x1xf32> to vector<8x4xf32>
    %62 = vector.broadcast %60 : vector<1x4xf32> to vector<8x4xf32>
    %63 = arith.mulf %61, %62 : vector<8x4xf32>
    %64 = arith.addf %58, %63 : vector<8x4xf32>
    %65 = vector.extract_strided_slice %44 {offsets = [0, 3], sizes = [8, 1], strides = [1, 1]} : vector<8x8xf32> to vector<8x1xf32>
    %c3_24 = arith.constant 3 : index
    %c0_25 = arith.constant 0 : index
    %66 = vector.load %arg4[%c3_24, %c0_25] : memref<8x4xf32, #tpu.memory_space<vmem>>, vector<1x4xf32>
    %67 = vector.broadcast %65 : vector<8x1xf32> to vector<8x4xf32>
    %68 = vector.broadcast %66 : vector<1x4xf32> to vector<8x4xf32>
    %69 = arith.mulf %67, %68 : vector<8x4xf32>
    %70 = arith.addf %64, %69 : vector<8x4xf32>
    %71 = vector.extract_strided_slice %44 {offsets = [0, 4], sizes = [8, 1], strides = [1, 1]} : vector<8x8xf32> to vector<8x1xf32>
    %c4 = arith.constant 4 : index
    %c0_26 = arith.constant 0 : index
    %72 = vector.load %arg4[%c4, %c0_26] : memref<8x4xf32, #tpu.memory_space<vmem>>, vector<1x4xf32>
    %73 = vector.broadcast %71 : vector<8x1xf32> to vector<8x4xf32>
    %74 = vector.broadcast %72 : vector<1x4xf32> to vector<8x4xf32>
    %75 = arith.mulf %73, %74 : vector<8x4xf32>
    %76 = arith.addf %70, %75 : vector<8x4xf32>
    %77 = vector.extract_strided_slice %44 {offsets = [0, 5], sizes = [8, 1], strides = [1, 1]} : vector<8x8xf32> to vector<8x1xf32>
    %c5 = arith.constant 5 : index
    %c0_27 = arith.constant 0 : index
    %78 = vector.load %arg4[%c5, %c0_27] : memref<8x4xf32, #tpu.memory_space<vmem>>, vector<1x4xf32>
    %79 = vector.broadcast %77 : vector<8x1xf32> to vector<8x4xf32>
    %80 = vector.broadcast %78 : vector<1x4xf32> to vector<8x4xf32>
    %81 = arith.mulf %79, %80 : vector<8x4xf32>
    %82 = arith.addf %76, %81 : vector<8x4xf32>
    %83 = vector.extract_strided_slice %44 {offsets = [0, 6], sizes = [8, 1], strides = [1, 1]} : vector<8x8xf32> to vector<8x1xf32>
    %c6 = arith.constant 6 : index
    %c0_28 = arith.constant 0 : index
    %84 = vector.load %arg4[%c6, %c0_28] : memref<8x4xf32, #tpu.memory_space<vmem>>, vector<1x4xf32>
    %85 = vector.broadcast %83 : vector<8x1xf32> to vector<8x4xf32>
    %86 = vector.broadcast %84 : vector<1x4xf32> to vector<8x4xf32>
    %87 = arith.mulf %85, %86 : vector<8x4xf32>
    %88 = arith.addf %82, %87 : vector<8x4xf32>
    %89 = vector.extract_strided_slice %44 {offsets = [0, 7], sizes = [8, 1], strides = [1, 1]} : vector<8x8xf32> to vector<8x1xf32>
    %c7 = arith.constant 7 : index
    %c0_29 = arith.constant 0 : index
    %90 = vector.load %arg4[%c7, %c0_29] : memref<8x4xf32, #tpu.memory_space<vmem>>, vector<1x4xf32>
    %91 = vector.broadcast %89 : vector<8x1xf32> to vector<8x4xf32>
    %92 = vector.broadcast %90 : vector<1x4xf32> to vector<8x4xf32>
    %93 = arith.mulf %91, %92 : vector<8x4xf32>
    %94 = arith.addf %88, %93 : vector<8x4xf32>
    %95 = arith.negf %94 : vector<8x4xf32>
    %96 = math.exp %95 : vector<8x4xf32>
    %cst_30 = arith.constant 1.000000e+00 : f32
    %97 = vector.broadcast %cst_30 : f32 to vector<8x4xf32>
    %98 = arith.addf %97, %96 : vector<8x4xf32>
    %99 = arith.divf %97, %98 : vector<8x4xf32>
    %100 = vector.extract_strided_slice %99 {offsets = [0, 0], sizes = [8, 1], strides = [1, 1]} : vector<8x4xf32> to vector<8x1xf32>
    %c0_31 = arith.constant 0 : index
    %101 = memref.load %arg6[%c0_31] : memref<8xf32, #tpu.memory_space<smem>>
    %102 = vector.broadcast %101 : f32 to vector<8x1xf32>
    %103 = arith.mulf %100, %102 : vector<8x1xf32>
    %104 = vector.extract_strided_slice %0 {offsets = [0, 0], sizes = [8, 256], strides = [1, 1]} : vector<8x1024xf32> to vector<8x256xf32>
    %105 = vector.broadcast %103 : vector<8x1xf32> to vector<8x256xf32>
    %106 = arith.mulf %105, %104 : vector<8x256xf32>
    %107 = vector.extract_strided_slice %99 {offsets = [0, 1], sizes = [8, 1], strides = [1, 1]} : vector<8x4xf32> to vector<8x1xf32>
    %c1_32 = arith.constant 1 : index
    %108 = memref.load %arg6[%c1_32] : memref<8xf32, #tpu.memory_space<smem>>
    %109 = vector.broadcast %108 : f32 to vector<8x1xf32>
    %110 = arith.mulf %107, %109 : vector<8x1xf32>
    %111 = vector.extract_strided_slice %0 {offsets = [0, 256], sizes = [8, 256], strides = [1, 1]} : vector<8x1024xf32> to vector<8x256xf32>
    %112 = vector.broadcast %110 : vector<8x1xf32> to vector<8x256xf32>
    %113 = arith.mulf %112, %111 : vector<8x256xf32>
    %114 = arith.addf %106, %113 : vector<8x256xf32>
    %115 = vector.extract_strided_slice %99 {offsets = [0, 2], sizes = [8, 1], strides = [1, 1]} : vector<8x4xf32> to vector<8x1xf32>
    %c2_33 = arith.constant 2 : index
    %116 = memref.load %arg6[%c2_33] : memref<8xf32, #tpu.memory_space<smem>>
    %117 = vector.broadcast %116 : f32 to vector<8x1xf32>
    %118 = arith.mulf %115, %117 : vector<8x1xf32>
    %119 = vector.extract_strided_slice %0 {offsets = [0, 512], sizes = [8, 256], strides = [1, 1]} : vector<8x1024xf32> to vector<8x256xf32>
    %120 = vector.broadcast %118 : vector<8x1xf32> to vector<8x256xf32>
    %121 = arith.mulf %120, %119 : vector<8x256xf32>
    %122 = arith.addf %114, %121 : vector<8x256xf32>
    %123 = vector.extract_strided_slice %99 {offsets = [0, 3], sizes = [8, 1], strides = [1, 1]} : vector<8x4xf32> to vector<8x1xf32>
    %c3_34 = arith.constant 3 : index
    %124 = memref.load %arg6[%c3_34] : memref<8xf32, #tpu.memory_space<smem>>
    %125 = vector.broadcast %124 : f32 to vector<8x1xf32>
    %126 = arith.mulf %123, %125 : vector<8x1xf32>
    %127 = vector.extract_strided_slice %0 {offsets = [0, 768], sizes = [8, 256], strides = [1, 1]} : vector<8x1024xf32> to vector<8x256xf32>
    %128 = vector.broadcast %126 : vector<8x1xf32> to vector<8x256xf32>
    %129 = arith.mulf %128, %127 : vector<8x256xf32>
    %130 = arith.addf %122, %129 : vector<8x256xf32>
    %c0_35 = arith.constant 0 : index
    %131 = memref.load %arg7[%c0_35] : memref<2xf32, #tpu.memory_space<smem>>
    %132 = vector.broadcast %131 : f32 to vector<8x256xf32>
    %133 = arith.addf %130, %132 : vector<8x256xf32>
    %134 = math.tanh %133 : vector<8x256xf32>
    %c0_36 = arith.constant 0 : index
    %c0_37 = arith.constant 0 : index
    %135 = vector.load %arg8[%c0_36, %c0_37] : memref<8x512xf32, #tpu.memory_space<vmem>>, vector<8x256xf32>
    tpu.vector_store %arg8[%c0_36, %c0_37], %134 {strides = array<i32>} : memref<8x512xf32, #tpu.memory_space<vmem>>, vector<8x256xf32>,
    %136 = vector.extract_strided_slice %99 {offsets = [0, 0], sizes = [8, 1], strides = [1, 1]} : vector<8x4xf32> to vector<8x1xf32>
    %c4_38 = arith.constant 4 : index
    %137 = memref.load %arg6[%c4_38] : memref<8xf32, #tpu.memory_space<smem>>
    %138 = vector.broadcast %137 : f32 to vector<8x1xf32>
    %139 = arith.mulf %136, %138 : vector<8x1xf32>
    %140 = vector.extract_strided_slice %0 {offsets = [0, 0], sizes = [8, 256], strides = [1, 1]} : vector<8x1024xf32> to vector<8x256xf32>
    %141 = vector.broadcast %139 : vector<8x1xf32> to vector<8x256xf32>
    %142 = arith.mulf %141, %140 : vector<8x256xf32>
    %143 = vector.extract_strided_slice %99 {offsets = [0, 1], sizes = [8, 1], strides = [1, 1]} : vector<8x4xf32> to vector<8x1xf32>
    %c5_39 = arith.constant 5 : index
    %144 = memref.load %arg6[%c5_39] : memref<8xf32, #tpu.memory_space<smem>>
    %145 = vector.broadcast %144 : f32 to vector<8x1xf32>
    %146 = arith.mulf %143, %145 : vector<8x1xf32>
    %147 = vector.extract_strided_slice %0 {offsets = [0, 256], sizes = [8, 256], strides = [1, 1]} : vector<8x1024xf32> to vector<8x256xf32>
    %148 = vector.broadcast %146 : vector<8x1xf32> to vector<8x256xf32>
    %149 = arith.mulf %148, %147 : vector<8x256xf32>
    %150 = arith.addf %142, %149 : vector<8x256xf32>
    %151 = vector.extract_strided_slice %99 {offsets = [0, 2], sizes = [8, 1], strides = [1, 1]} : vector<8x4xf32> to vector<8x1xf32>
    %c6_40 = arith.constant 6 : index
    %152 = memref.load %arg6[%c6_40] : memref<8xf32, #tpu.memory_space<smem>>
    %153 = vector.broadcast %152 : f32 to vector<8x1xf32>
    %154 = arith.mulf %151, %153 : vector<8x1xf32>
    %155 = vector.extract_strided_slice %0 {offsets = [0, 512], sizes = [8, 256], strides = [1, 1]} : vector<8x1024xf32> to vector<8x256xf32>
    %156 = vector.broadcast %154 : vector<8x1xf32> to vector<8x256xf32>
    %157 = arith.mulf %156, %155 : vector<8x256xf32>
    %158 = arith.addf %150, %157 : vector<8x256xf32>
    %159 = vector.extract_strided_slice %99 {offsets = [0, 3], sizes = [8, 1], strides = [1, 1]} : vector<8x4xf32> to vector<8x1xf32>
    %c7_41 = arith.constant 7 : index
    %160 = memref.load %arg6[%c7_41] : memref<8xf32, #tpu.memory_space<smem>>
    %161 = vector.broadcast %160 : f32 to vector<8x1xf32>
    %162 = arith.mulf %159, %161 : vector<8x1xf32>
    %163 = vector.extract_strided_slice %0 {offsets = [0, 768], sizes = [8, 256], strides = [1, 1]} : vector<8x1024xf32> to vector<8x256xf32>
    %164 = vector.broadcast %162 : vector<8x1xf32> to vector<8x256xf32>
    %165 = arith.mulf %164, %163 : vector<8x256xf32>
    %166 = arith.addf %158, %165 : vector<8x256xf32>
    %c1_42 = arith.constant 1 : index
    %167 = memref.load %arg7[%c1_42] : memref<2xf32, #tpu.memory_space<smem>>
    %168 = vector.broadcast %167 : f32 to vector<8x256xf32>
    %169 = arith.addf %166, %168 : vector<8x256xf32>
    %170 = math.tanh %169 : vector<8x256xf32>
    %c0_43 = arith.constant 0 : index
    %c256 = arith.constant 256 : index
    %171 = vector.load %arg8[%c0_43, %c256] : memref<8x512xf32, #tpu.memory_space<vmem>>, vector<8x256xf32>
    tpu.vector_store %arg8[%c0_43, %c256], %170 {strides = array<i32>} : memref<8x512xf32, #tpu.memory_space<vmem>>, vector<8x256xf32>,
    return
  }
  func.func @transform_0(%arg0: i32) -> (i32, i32) {
    %c0_i32 = arith.constant 0 : i32
    %c0_i32_0 = arith.constant 0 : i32
    return %arg0, %c0_i32 : i32, i32
  }
  func.func @transform_1(%arg0: i32) -> (i32, i32) {
    %c0_i32 = arith.constant 0 : i32
    %c0_i32_0 = arith.constant 0 : i32
    %c0_i32_1 = arith.constant 0 : i32
    return %c0_i32, %c0_i32_0 : i32, i32
  }
  func.func @transform_2(%arg0: i32) -> (i32, i32) {
    %c0_i32 = arith.constant 0 : i32
    %c0_i32_0 = arith.constant 0 : i32
    %c0_i32_1 = arith.constant 0 : i32
    return %c0_i32, %c0_i32_0 : i32, i32
  }
  func.func @transform_3(%arg0: i32) -> (i32, i32) {
    %c0_i32 = arith.constant 0 : i32
    %c0_i32_0 = arith.constant 0 : i32
    %c0_i32_1 = arith.constant 0 : i32
    return %c0_i32, %c0_i32_0 : i32, i32
  }
  func.func @transform_4(%arg0: i32) -> (i32, i32) {
    %c0_i32 = arith.constant 0 : i32
    %c0_i32_0 = arith.constant 0 : i32
    %c0_i32_1 = arith.constant 0 : i32
    return %c0_i32, %c0_i32_0 : i32, i32
  }
  func.func @transform_5(%arg0: i32) -> i32 {
    %c0_i32 = arith.constant 0 : i32
    %c0_i32_0 = arith.constant 0 : i32
    return %c0_i32 : i32
  }
  func.func @transform_6(%arg0: i32) -> i32 {
    %c0_i32 = arith.constant 0 : i32
    %c0_i32_0 = arith.constant 0 : i32
    return %c0_i32 : i32
  }
  func.func @transform_7(%arg0: i32) -> (i32, i32) {
    %c0_i32 = arith.constant 0 : i32
    %c0_i32_0 = arith.constant 0 : i32
    return %arg0, %c0_i32 : i32, i32
  }
}

</mosaic_0001>

<llo_original>
// kernel: direction_heading.1
$region0: #{direction_heading.1}
  #allocation0 [shape = 'u32[]', space=smem, size = 0x4, offset = 0x4, fixed_abs, tag = 'smem constant byte address 0x4 - core index']
  #allocation1 [shape = 'u32[144,128]{1,0:T(1,128)}', space=vmem, size = 0x12000, scoped, tag = 'internal scratch']
  %s0 = inlined_call_operand.vmem [shape: f32[8,1024], index: 0, kind: input, shape index: {}]
  %s1 = inlined_call_operand.vmem [shape: f32[4,8], index: 1, kind: input, shape index: {}]
  %s2 = inlined_call_operand.vmem [shape: f32[1,8], index: 2, kind: input, shape index: {}]
  %s3 = inlined_call_operand.vmem [shape: f32[8,4], index: 3, kind: input, shape index: {}]
  %s4 = inlined_call_operand.vmem [shape: f32[1,4], index: 4, kind: input, shape index: {}]
  %s5 = inlined_call_operand.vmem [shape: f32[8], index: 5, kind: input, shape index: {}]
  %s6 = inlined_call_operand.vmem [shape: f32[2], index: 6, kind: input, shape index: {}]
  %s7 = inlined_call_operand.vmem [shape: f32[8,512], index: 7, kind: output, shape index: {}]
  %s8 = sld [smem:[#allocation0]]
  $region46: #{direction_heading.1} parent=0
    _
  %s10 = ssub.s32 1, %s8
  %s11 = scalar_select 0, %s10, %s8
  $region1: #{direction_heading.1} parent=0
    #allocation2 [shape = 'u8[512]{0}', space=smem, size = 0x200, scoped, tag = 'input window, operand 5, single buffered']
    #allocation3 [shape = 's32[1]{0}', space=sflag, size = 0x4, scoped, tag = 'scoped memory for direction_heading.1']
    #allocation4 [shape = 'u8[512]{0}', space=smem, size = 0x200, scoped, tag = 'input window, operand 6, single buffered']
    #allocation5 [shape = 's32[1]{0}', space=sflag, size = 0x4, scoped, tag = 'scoped memory for direction_heading.1']
    %12 = vsyncpa [#allocation3], 0
    %13 = vsyncpa [#allocation5], 0
    // Predicated region
    $region2: #{direction_heading.1} parent=1 // pred_check
      _
    $region3: #{direction_heading.1} parent=1 // pred_check_branch
      %15 = sbr.rel (0) target = $region5
    $region4: #{direction_heading.1} parent=1 // pred_region
      _
    $region5: #{direction_heading.1} parent=1 // pred_fallthru
      _
    // Predicated region
    $region6: #{direction_heading.1} parent=1 // pred_check
      _
    $region7: #{direction_heading.1} parent=1 // pred_check_branch
      %17 = sbr.rel (0) target = $region9
    $region8: #{direction_heading.1} parent=1 // pred_region
      _
    $region9: #{direction_heading.1} parent=1 // pred_fallthru
      _
    // Predicated region
    $region10: #{direction_heading.1} parent=1 // pred_check
      _
    $region11: #{direction_heading.1} parent=1 // pred_check_branch
      %19 = sbr.rel (0) target = $region13
    $region12: #{direction_heading.1} parent=1 // pred_region
      _
    $region13: #{direction_heading.1} parent=1 // pred_fallthru
      _
    // Predicated region
    $region14: #{direction_heading.1} parent=1 // pred_check
      _
    $region15: #{direction_heading.1} parent=1 // pred_check_branch
      %21 = sbr.rel (0) target = $region17
    $region16: #{direction_heading.1} parent=1 // pred_region
      _
    $region17: #{direction_heading.1} parent=1 // pred_fallthru
      _
    // Predicated region
    $region18: #{direction_heading.1} parent=1 // pred_check
      _
    $region19: #{direction_heading.1} parent=1 // pred_check_branch
      %23 = sbr.rel (0) target = $region21
    $region20: #{direction_heading.1} parent=1 // pred_region
      _
    $region21: #{direction_heading.1} parent=1 // pred_fallthru
      _
    // Predicated region
    $region22: #{direction_heading.1} parent=1 // pred_check
      _
    $region23: #{direction_heading.1} parent=1 // pred_check_branch
      %25 = sbr.rel (0) target = $region25
    $region24: #{direction_heading.1} parent=1 // pred_region
      %s27 = ssub.s32 16, 16
      %28 = vsyncadd [#allocation3], %s27
      %s30 = sshll.u32 %s5, 4
      %s31 = int_to_ptr.vmem [resolvable:$true] %s30
      %33 = dma.vmem_to_smem %s31, 16, [#allocation2], [#allocation3]
    $region25: #{direction_heading.1} parent=1 // pred_fallthru
      _
    // Predicated region
    $region26: #{direction_heading.1} parent=1 // pred_check
      _
    $region27: #{direction_heading.1} parent=1 // pred_check_branch
      %35 = sbr.rel (0) target = $region29
    $region28: #{direction_heading.1} parent=1 // pred_region
      %s37 = ssub.s32 16, 16
      %38 = vsyncadd [#allocation5], %s37
      %s40 = sshll.u32 %s6, 4
      %s41 = int_to_ptr.vmem [resolvable:$true] %s40
      %43 = dma.vmem_to_smem %s41, 16, [#allocation4], [#allocation5]
    $region29: #{direction_heading.1} parent=1 // pred_fallthru
      _
    // Predicated region
    $region30: #{direction_heading.1} parent=1 // pred_check
      _
    $region31: #{direction_heading.1} parent=1 // pred_check_branch
      %45 = sbr.rel (0) target = $region33
    $region32: #{direction_heading.1} parent=1 // pred_region
      %46 = dma.done [#allocation3], 16
    $region33: #{direction_heading.1} parent=1 // pred_fallthru
      _
    // Predicated region
    $region34: #{direction_heading.1} parent=1 // pred_check
      _
    $region35: #{direction_heading.1} parent=1 // pred_check_branch
      %48 = sbr.rel (0) target = $region37
    $region36: #{direction_heading.1} parent=1 // pred_region
      %49 = dma.done [#allocation5], 16
    $region37: #{direction_heading.1} parent=1 // pred_fallthru
      _
    %50 = sfence
    %v51 = vld [vmem:[%s0] sm:$0xff]
    %v52 = vld [vmem:[%s0 + $0x8] sm:$0xff]
    %v53 = vld [vmem:[%s0 + $0x10] sm:$0xff]
    %v54 = vld [vmem:[%s0 + $0x18] sm:$0xff]
    %v55 = vld [vmem:[%s0 + $0x20] sm:$0xff]
    %v56 = vld [vmem:[%s0 + $0x28] sm:$0xff]
    %v57 = vld [vmem:[%s0 + $0x30] sm:$0xff]
    %v58 = vld [vmem:[%s0 + $0x38] sm:$0xff]
    %v59 = vadd.f32 %v51, %v52
    %60 = vadd.xlane.f32.xlu0 %v59
    %v61 = vpop.xlane.xlu0 %60
    %v62 = vmul.f32 %v61, 0.00390625
    %v63 = vadd.f32 %v53, %v54
    %64 = vadd.xlane.f32.xlu0 %v63
    %v65 = vpop.xlane.xlu0 %64
    %v66 = vmul.f32 %v65, 0.00390625
    %v67 = vadd.f32 %v55, %v56
    %68 = vadd.xlane.f32.xlu0 %v67
    %v69 = vpop.xlane.xlu0 %68
    %v70 = vmul.f32 %v69, 0.00390625
    %v71 = vadd.f32 %v57, %v58
    %72 = vadd.xlane.f32.xlu0 %v71
    %v73 = vpop.xlane.xlu0 %72
    %v74 = vmul.f32 %v73, 0.00390625
    %v75 = vld [vmem:[%s2] sm:$0x1]
    %v76 = vld [vmem:[%s1] sm:$0x1]
    %v77 = vlaneseq
    %v78 = vshrl.u32 %v77, 7
    %v79 = vsub.s32 0, %v78
    %v80 = vrot.slane %v76, %v79
    %v81 = vmul.f32 %v62, %v80
    %v83 = vlaneseq
    %v84 = vshrl.u32 %v83, 7
    %v85 = vsub.s32 0, %v84
    %v86 = vrot.slane %v75, %v85
    %v88 = vadd.f32 %v86, %v81
    %v89 = vld [vmem:[%s1 + $0x1] sm:$0x1]
    %v90 = vlaneseq
    %v91 = vshrl.u32 %v90, 7
    %v92 = vsub.s32 0, %v91
    %v93 = vrot.slane %v89, %v92
    %v94 = vmul.f32 %v66, %v93
    %v95 = vadd.f32 %v88, %v94
    %v96 = vld [vmem:[%s1 + $0x2] sm:$0x1]
    %v97 = vlaneseq
    %v98 = vshrl.u32 %v97, 7
    %v99 = vsub.s32 0, %v98
    %v100 = vrot.slane %v96, %v99
    %v101 = vmul.f32 %v70, %v100
    %v102 = vadd.f32 %v95, %v101
    %v103 = vld [vmem:[%s1 + $0x3] sm:$0x1]
    %v104 = vlaneseq
    %v105 = vshrl.u32 %v104, 7
    %v106 = vsub.s32 0, %v105
    %v107 = vrot.slane %v103, %v106
    %v108 = vmul.f32 %v74, %v107
    %v109 = vadd.f32 %v102, %v108
    %v110 = vmax.f32 %v109, 0.0
    %v111 = vld [vmem:[%s4] sm:$0x1]
    %v112 = vld [vmem:[%s3] sm:$0x1]
    %114 = vset.pattern.permute.xlu0 0
    %115 = vperm.xlu0 %114, %v110
    %v116 = vpop.permute.xlu0 %115
    %v118 = vlaneseq
    %v119 = vshrl.u32 %v118, 7
    %v120 = vsub.s32 0, %v119
    %v121 = vrot.slane %v112, %v120
    %v122 = vmul.f32 %v116, %v121
    %v124 = vlaneseq
    %v125 = vshrl.u32 %v124, 7
    %v126 = vsub.s32 0, %v125
    %v127 = vrot.slane %v111, %v126
    %v129 = vadd.f32 %v127, %v122
    %v130 = vld [vmem:[%s3 + $0x1] sm:$0x1]
    %131 = vset.pattern.permute.xlu0 1
    %132 = vperm.xlu0 %131, %v110
    %v133 = vpop.permute.xlu0 %132
    %v135 = vlaneseq
    %v136 = vshrl.u32 %v135, 7
    %v137 = vsub.s32 0, %v136
    %v138 = vrot.slane %v130, %v137
    %v139 = vmul.f32 %v133, %v138
    %v140 = vadd.f32 %v129, %v139
    %v141 = vld [vmem:[%s3 + $0x2] sm:$0x1]
    %142 = vset.pattern.permute.xlu0 2
    %143 = vperm.xlu0 %142, %v110
    %v144 = vpop.permute.xlu0 %143
    %v146 = vlaneseq
    %v147 = vshrl.u32 %v146, 7
    %v148 = vsub.s32 0, %v147
    %v149 = vrot.slane %v141, %v148
    %v150 = vmul.f32 %v144, %v149
    %v151 = vadd.f32 %v140, %v150
    %v152 = vld [vmem:[%s3 + $0x3] sm:$0x1]
    %153 = vset.pattern.permute.xlu0 3
    %154 = vperm.xlu0 %153, %v110
    %v155 = vpop.permute.xlu0 %154
    %v157 = vlaneseq
    %v158 = vshrl.u32 %v157, 7
    %v159 = vsub.s32 0, %v158
    %v160 = vrot.slane %v152, %v159
    %v161 = vmul.f32 %v155, %v160
    %v162 = vadd.f32 %v151, %v161
    %v163 = vld [vmem:[%s3 + $0x4] sm:$0x1]
    %164 = vset.pattern.permute.xlu0 4
    %165 = vperm.xlu0 %164, %v110
    %v166 = vpop.permute.xlu0 %165
    %v168 = vlaneseq
    %v169 = vshrl.u32 %v168, 7
    %v170 = vsub.s32 0, %v169
    %v171 = vrot.slane %v163, %v170
    %v172 = vmul.f32 %v166, %v171
    %v173 = vadd.f32 %v162, %v172
    %v174 = vld [vmem:[%s3 + $0x5] sm:$0x1]
    %175 = vset.pattern.permute.xlu0 5
    %176 = vperm.xlu0 %175, %v110
    %v177 = vpop.permute.xlu0 %176
    %v179 = vlaneseq
    %v180 = vshrl.u32 %v179, 7
    %v181 = vsub.s32 0, %v180
    %v182 = vrot.slane %v174, %v181
    %v183 = vmul.f32 %v177, %v182
    %v184 = vadd.f32 %v173, %v183
    %v185 = vld [vmem:[%s3 + $0x6] sm:$0x1]
    %186 = vset.pattern.permute.xlu0 6
    %187 = vperm.xlu0 %186, %v110
    %v188 = vpop.permute.xlu0 %187
    %v190 = vlaneseq
    %v191 = vshrl.u32 %v190, 7
    %v192 = vsub.s32 0, %v191
    %v193 = vrot.slane %v185, %v192
    %v194 = vmul.f32 %v188, %v193
    %v195 = vadd.f32 %v184, %v194
    %v196 = vld [vmem:[%s3 + $0x7] sm:$0x1]
    %197 = vset.pattern.permute.xlu0 7
    %198 = vperm.xlu0 %197, %v110
    %v199 = vpop.permute.xlu0 %198
    %v201 = vlaneseq
    %v202 = vshrl.u32 %v201, 7
    %v203 = vsub.s32 0, %v202
    %v204 = vrot.slane %v196, %v203
    %v205 = vmul.f32 %v199, %v204
    %v206 = vadd.f32 %v195, %v205
    %v207 = vxor.u32 %v206, 2147483648
    %v208 = vmul.f32 %v207, 1.442695
    %v209 = vpow.pop %v208
    %v210 = vadd.f32 %v209, 1.0
    %v211 = vrcp.pop %v210
    %v212 = vmul.f32 1.0, %v211
    %s213 = sld [smem:[#allocation2]]
    %v214 = vstv %s213
    %v215 = vmul.f32 %v212, %v214
    %217 = vset.pattern.permute.xlu0 0
    %218 = vperm.xlu0 %217, %v215
    %v219 = vpop.permute.xlu0 %218
    %v221 = vmul.f32 %v219, %v51
    %v222 = vmul.f32 %v219, %v52
    %s223 = sld [smem:[#allocation2 + $0x1]]
    %v224 = vstv %s223
    %v225 = vmul.f32 %v212, %v224
    %227 = vset.pattern.permute.xlu0 1
    %228 = vperm.xlu0 %227, %v225
    %v229 = vpop.permute.xlu0 %228
    %v231 = vmul.f32 %v229, %v53
    %v232 = vmul.f32 %v229, %v54
    %v233 = vadd.f32 %v221, %v231
    %v234 = vadd.f32 %v222, %v232
    %s235 = sld [smem:[#allocation2 + $0x2]]
    %v236 = vstv %s235
    %v237 = vmul.f32 %v212, %v236
    %239 = vset.pattern.permute.xlu0 2
    %240 = vperm.xlu0 %239, %v237
    %v241 = vpop.permute.xlu0 %240
    %v243 = vmul.f32 %v241, %v55
    %v244 = vmul.f32 %v241, %v56
    %v245 = vadd.f32 %v233, %v243
    %v246 = vadd.f32 %v234, %v244
    %s247 = sld [smem:[#allocation2 + $0x3]]
    %v248 = vstv %s247
    %v249 = vmul.f32 %v212, %v248
    %251 = vset.pattern.permute.xlu0 3
    %252 = vperm.xlu0 %251, %v249
    %v253 = vpop.permute.xlu0 %252
    %v255 = vmul.f32 %v253, %v57
    %v256 = vmul.f32 %v253, %v58
    %v257 = vadd.f32 %v245, %v255
    %v258 = vadd.f32 %v246, %v256
    %s259 = sld [smem:[#allocation4]]
    %v260 = vstv %s259
    %v261 = vadd.f32 %v257, %v260
    %v262 = vadd.f32 %v258, %v260
    %v263 = vtanh.pop %v261
    %v264 = vtanh.pop %v262
    %265 = vst [vmem:[%s7] sm:$0xff] %v263
    %266 = vst [vmem:[%s7 + $0x8] sm:$0xff] %v264
    %s267 = sld [smem:[#allocation2 + $0x4]]
    %v268 = vstv %s267
    %v269 = vmul.f32 %v212, %v268
    %271 = vset.pattern.permute.xlu0 0
    %272 = vperm.xlu0 %271, %v269
    %v273 = vpop.permute.xlu0 %272
    %v275 = vmul.f32 %v273, %v51
    %v276 = vmul.f32 %v273, %v52
    %s277 = sld [smem:[#allocation2 + $0x5]]
    %v278 = vstv %s277
    %v279 = vmul.f32 %v212, %v278
    %281 = vset.pattern.permute.xlu0 1
    %282 = vperm.xlu0 %281, %v279
    %v283 = vpop.permute.xlu0 %282
    %v285 = vmul.f32 %v283, %v53
    %v286 = vmul.f32 %v283, %v54
    %v287 = vadd.f32 %v275, %v285
    %v288 = vadd.f32 %v276, %v286
    %s289 = sld [smem:[#allocation2 + $0x6]]
    %v290 = vstv %s289
    %v291 = vmul.f32 %v212, %v290
    %293 = vset.pattern.permute.xlu0 2
    %294 = vperm.xlu0 %293, %v291
    %v295 = vpop.permute.xlu0 %294
    %v297 = vmul.f32 %v295, %v55
    %v298 = vmul.f32 %v295, %v56
    %v299 = vadd.f32 %v287, %v297
    %v300 = vadd.f32 %v288, %v298
    %s301 = sld [smem:[#allocation2 + $0x7]]
    %v302 = vstv %s301
    %v303 = vmul.f32 %v212, %v302
    %305 = vset.pattern.permute.xlu0 3
    %306 = vperm.xlu0 %305, %v303
    %v307 = vpop.permute.xlu0 %306
    %v309 = vmul.f32 %v307, %v57
    %v310 = vmul.f32 %v307, %v58
    %v311 = vadd.f32 %v299, %v309
    %v312 = vadd.f32 %v300, %v310
    %s313 = sld [smem:[#allocation4 + $0x1]]
    %v314 = vstv %s313
    %v315 = vadd.f32 %v311, %v314
    %v316 = vadd.f32 %v312, %v314
    %v317 = vtanh.pop %v315
    %v318 = vtanh.pop %v316
    %319 = vst [vmem:[%s7 + $0x10] sm:$0xff] %v317
    %320 = vst [vmem:[%s7 + $0x18] sm:$0xff] %v318
    // Predicated region
    $region38: #{direction_heading.1} parent=1 // pred_check
      _
    $region39: #{direction_heading.1} parent=1 // pred_check_branch
      %322 = sbr.rel (0) target = $region41
    $region40: #{direction_heading.1} parent=1 // pred_region
      _
    $region41: #{direction_heading.1} parent=1 // pred_fallthru
      _
    // Predicated region
    $region42: #{direction_heading.1} parent=1 // pred_check
      _
    $region43: #{direction_heading.1} parent=1 // pred_check_branch
      %324 = sbr.rel (0) target = $region45
    $region44: #{direction_heading.1} parent=1 // pred_region
      _
    $region45: #{direction_heading.1} parent=1 // pred_fallthru
      _
    %325 = vsyncpa [#allocation3], 1
    %326 = vsyncpa [#allocation5], 1

</llo_original>
